<compile_context>
chip_gen: v7x
topology: tpu7x:2x2x1
jax: 0.10.0
libtpu: 0.0.40
codegen_flags: <defaults>
</compile_context>

<pallas_src>
import functools

import jax
import jax.numpy as jnp
from jax.experimental import pallas as pl
from jax.experimental.pallas import tpu as pltpu


def _round_up(x, m):
    return (x + m - 1) // m * m


def _mlp_kernel(x_ref, w_in_ref, b_in_ref, w_hid_ref, b_hid_ref,
                w_out_ref, b_out_ref, out_ref, h_ref, *, unroll_hidden):
    """One grid step = the full MLP for one variable on one batch tile.

    x_ref     : [Bt, F]        f32   (batch tile, shared across variables)
    w_in_ref  : [1, F, H]      bf16
    b_in_ref  : [1, 1, H]      f32
    w_hid_ref : [1, L1, H, H]  bf16  (resident per-variable hidden stack)
    b_hid_ref : [1, L1, 1, H]  f32
    w_out_ref : [1, H, 1]      bf16  (output layer stored as a column)
    b_out_ref : [V]            f32   (SMEM)
    out_ref   : [1, 1, Bt]     f32   (lane-dense output row)
    h_ref     : [Bt, H]        bf16  (activation scratch, stored pre-cast)
    """
    v = pl.program_id(0)

    # Input layer: [Bt, F] x [F, H] -> [Bt, H]; bf16 MXU, f32 accumulate.
    xb = x_ref[...].astype(jnp.bfloat16)
    z = jnp.dot(xb, w_in_ref[0], preferred_element_type=jnp.float32)
    h_ref[...] = jnp.maximum(z + b_in_ref[0], 0.0).astype(jnp.bfloat16)

    n_hidden = w_hid_ref.shape[1]

    def hidden_layer(l):
        zh = jnp.dot(h_ref[...], w_hid_ref[0, l],
                     preferred_element_type=jnp.float32)
        h_ref[...] = jnp.maximum(zh + b_hid_ref[0, l], 0.0).astype(jnp.bfloat16)

    if unroll_hidden:
        for l in range(n_hidden):            # static layer indices, full unroll
            hidden_layer(l)
    else:
        @pl.loop(0, n_hidden)                # bounded live ranges for deep stacks
        def _(l):
            hidden_layer(l)

    # Output layer H -> 1 on the MXU ([Bt,H] x [H,1] -> [Bt,1]); only the tiny
    # [Bt,1] result moves through the XLU into the lane-dense [1,Bt] row.
    y = jnp.dot(h_ref[...], w_out_ref[0], preferred_element_type=jnp.float32)
    out_ref[0] = jnp.transpose(y) + b_out_ref[v]


def _pick_batch_tiling(batch, batch_tile):
    """Returns (b_tile, b_pad); padding waste < 128 rows (< 8 for tiny batches)."""
    if batch < 128:
        bt = _round_up(batch, 8)
        return bt, bt
    m = _round_up(batch, 128) // 128
    max_t = max(1, batch_tile // 128)
    t = max(t for t in range(1, max_t + 1) if m % t == 0)
    return 128 * t, 128 * m


def fvm_network_forward(x, params, *, batch_tile=512):
    """x: [B, 15] float32.  Returns [B, V] float32 (== torch.cat(outputs, dim=1))."""
    w_in, b_in = params["w_in"], params["b_in"]          # [V,F,H] bf16, [V,1,H] f32
    w_hid, b_hid = params["w_hid"], params["b_hid"]      # [V,L1,H,H] bf16, [V,L1,1,H] f32
    w_out, b_out = params["w_out"], params["b_out"]      # [V,H,1] bf16, [V] f32

    V, F, H = w_in.shape
    L1 = w_hid.shape[1]
    B = x.shape[0]

    b_tile, b_pad = _pick_batch_tiling(B, batch_tile)
    n_bt = b_pad // b_tile
    if b_pad != B:
        x = jnp.pad(x, ((0, b_pad - B), (0, 0)))

    # Single-buffer the resident hidden-weight stack when it is large: its
    # second pipeline buffer only prefetches across variable transitions
    # (amortized over n_bt batch tiles) and would crowd v7x's 64 MiB VMEM.
    hid_bytes = L1 * H * H * w_hid.dtype.itemsize
    hid_kwargs = {"pipeline_mode": pl.Buffered(1)} if hid_bytes > (8 << 20) else {}

    kernel = functools.partial(_mlp_kernel, unroll_hidden=(L1 <= 4))

    out = pl.pallas_call(
        kernel,
        out_shape=jax.ShapeDtypeStruct((V, 1, b_pad), jnp.float32),
        grid_spec=pltpu.PrefetchScalarGridSpec(
            num_scalar_prefetch=0,
            # Batch innermost: weight block indices don't change across the
            # inner axis, so their DMAs are skipped (weights stay resident).
            grid=(V, n_bt),
            in_specs=[
                pl.BlockSpec((b_tile, F), lambda v, b: (b, 0)),               # x tile
                pl.BlockSpec((1, F, H), lambda v, b: (v, 0, 0)),              # w_in
                pl.BlockSpec((1, 1, H), lambda v, b: (v, 0, 0)),              # b_in
                pl.BlockSpec((1, L1, H, H), lambda v, b: (v, 0, 0, 0),
                             **hid_kwargs),                                   # w_hid
                pl.BlockSpec((1, L1, 1, H), lambda v, b: (v, 0, 0, 0)),       # b_hid
                pl.BlockSpec((1, H, 1), lambda v, b: (v, 0, 0)),              # w_out
                pl.BlockSpec(memory_space=pltpu.MemorySpace.SMEM),            # b_out [V]
            ],
            out_specs=pl.BlockSpec((1, 1, b_tile), lambda v, b: (v, 0, b)),   # lane-dense
            scratch_shapes=[pltpu.VMEM((b_tile, H), jnp.bfloat16)],           # activations
        ),
        compiler_params=pltpu.CompilerParams(
            dimension_semantics=("parallel",
                                 "parallel" if n_bt >= 4 else "arbitrary"),
            vmem_limit_bytes=48 * 1024 * 1024),
    )(x, w_in, b_in, w_hid, b_hid, w_out, b_out)

    # [V, 1, B_pad] -> [B, V]: drop batch padding, match torch.cat(dim=1).
    return out[:, 0, :B].T


def init_params(key, n_vars, input_shape, hidden_size, hidden_layers,
                weights_dtype=jnp.bfloat16):
    """PyTorch-Linear-style init (U[-1/sqrt(fan_in), 1/sqrt(fan_in)]).

    NOTE: weights default to bf16 (f32 MXU accumulation); the PyTorch module is
    f32 -- pass weights_dtype=jnp.float32 if bit-closer numerics are required.
    """
    assert hidden_layers >= 2, "kernel expects at least one hidden H->H layer"
    H, F, L1 = hidden_size, input_shape, hidden_layers - 1
    keys = jax.random.split(key, 6)

    def u(k, shape, fan_in, dtype=jnp.float32):
        bound = 1.0 / jnp.sqrt(jnp.float32(fan_in))
        return jax.random.uniform(k, shape, jnp.float32, -bound, bound).astype(dtype)

    return {
        "w_in":  u(keys[0], (n_vars, F, H), F, weights_dtype),
        "b_in":  u(keys[1], (n_vars, 1, H), F),
        "w_hid": u(keys[2], (n_vars, L1, H, H), H, weights_dtype),
        "b_hid": u(keys[3], (n_vars, L1, 1, H), H),
        "w_out": u(keys[4], (n_vars, H, 1), H, weights_dtype),   # stored as columns
        "b_out": u(keys[5], (n_vars,), H),
    }


def reference_forward(x, params):
    """Pure-JAX reference using the same bf16-weight / f32-accumulate recipe."""
    V = params["w_in"].shape[0]
    L1 = params["w_hid"].shape[1]
    xb = x.astype(jnp.bfloat16)
    outs = []
    for v in range(V):
        h = jnp.dot(xb, params["w_in"][v], preferred_element_type=jnp.float32)
        h = jnp.maximum(h + params["b_in"][v], 0.0)
        for l in range(L1):
            z = jnp.dot(h.astype(jnp.bfloat16), params["w_hid"][v, l],
                        preferred_element_type=jnp.float32)
            h = jnp.maximum(z + params["b_hid"][v, l], 0.0)
        y = jnp.dot(h.astype(jnp.bfloat16), params["w_out"][v],
                    preferred_element_type=jnp.float32)          # [B, 1]
        outs.append(y[:, 0] + params["b_out"][v])                # [B]
    return jnp.stack(outs, axis=1)                               # [B, V]


if __name__ == "__main__":
    # Small, module-consistent shapes: input features fixed at 15 by the module.
    input_shape = 15
    vars_list = ["U_x", "U_y", "T"]
    V = len(vars_list)

    key = jax.random.PRNGKey(0)
    k1, k2, k3, k4, k5 = jax.random.split(key, 5)

    # Shallow stack (unrolled hidden loop) -- module defaults (H=512, 11 layers)
    # shrunk for the demo; deep stack exercises the pl.loop path.
    params_shallow = init_params(k1, V, input_shape, hidden_size=128, hidden_layers=3)
    params_deep = init_params(k2, V, input_shape, hidden_size=128, hidden_layers=6)

    # Cover: tiny single tile (B=8), single 384-row tile (B=260, padding<128),
    # and the multi-batch-tile + dynamic-layer-loop path (B=600 -> 5 tiles).
    cases = [(params_shallow, 8, k3), (params_shallow, 260, k4), (params_deep, 600, k5)]
    for params, batch, kx in cases:
        x = jax.random.normal(kx, (batch, input_shape), dtype=jnp.float32)
        y = jax.block_until_ready(fvm_network_forward(x, params))
        y_ref = reference_forward(x, params)
        assert y.shape == (batch, V), (y.shape, batch, V)
        assert jnp.allclose(y, y_ref, atol=1e-2, rtol=1e-2), \
            f"mismatch vs reference at batch={batch}"

    print("KERNEL_OK")
</pallas_src>

<mosaic_0001>
module attributes {stable_mosaic.version = 11 : i64} {
  func.func @_mlp_kernel(%arg0: i32, %arg1: i32, %arg2: memref<8x15xf32, #tpu.memory_space<vmem>>, %arg3: memref<1x15x128xbf16, #tpu.memory_space<vmem>>, %arg4: memref<1x1x128xf32, #tpu.memory_space<vmem>>, %arg5: memref<1x2x128x128xbf16, #tpu.memory_space<vmem>>, %arg6: memref<1x2x1x128xf32, #tpu.memory_space<vmem>>, %arg7: memref<1x128x1xbf16, #tpu.memory_space<vmem>>, %arg8: memref<3xf32, #tpu.memory_space<smem>>, %arg9: memref<1x1x8xf32, #tpu.memory_space<vmem>>, %arg10: memref<8x128xbf16, #tpu.memory_space<vmem>>) attributes {dimension_semantics = [#tpu.dimension_semantics<parallel>, #tpu.dimension_semantics<arbitrary>], iteration_bounds = array<i64: 3, 1>, scalar_prefetch = 0 : i64, scratch_operands = 1 : i64, tpu.core_type = #tpu.core_type<tc>, window_params = [{transform_indices = @transform_0, window_bounds = array<i64: 8, 15>}, {transform_indices = @transform_1, window_bounds = array<i64: 1, 15, 128>}, {transform_indices = @transform_2, window_bounds = array<i64: 1, 1, 128>}, {transform_indices = @transform_3, window_bounds = array<i64: 1, 2, 128, 128>}, {transform_indices = @transform_4, window_bounds = array<i64: 1, 2, 1, 128>}, {transform_indices = @transform_5, window_bounds = array<i64: 1, 128, 1>}, {transform_indices = @transform_6, window_bounds = array<i64: 3>}, {transform_indices = @transform_7, window_bounds = array<i64: 1, 1, 8>}]} {
    %c0 = arith.constant 0 : index
    %c0_0 = arith.constant 0 : index
    %0 = vector.load %arg2[%c0, %c0_0] : memref<8x15xf32, #tpu.memory_space<vmem>>, vector<8x15xf32>
    %1 = arith.truncf %0 : vector<8x15xf32> to vector<8x15xbf16>
    %c0_1 = arith.constant 0 : index
    %c0_2 = arith.constant 0 : index
    %c0_3 = arith.constant 0 : index
    %2 = vector.load %arg3[%c0_1, %c0_2, %c0_3] : memref<1x15x128xbf16, #tpu.memory_space<vmem>>, vector<1x15x128xbf16>
    %3 = vector.shape_cast %2 : vector<1x15x128xbf16> to vector<15x128xbf16>
    %cst = arith.constant dense<0.000000e+00> : vector<8x128xf32>
    %4 = tpu.matmul %1, %3, %cst {dimension_numbers = #tpu.dot_dimension_numbers<[1], [0], [0], [1], [0, 0, 1, 1], [], []>} : vector<8x15xbf16>, vector<15x128xbf16>, vector<8x128xf32> -> vector<8x128xf32>
    %c0_4 = arith.constant 0 : index
    %c0_5 = arith.constant 0 : index
    %c0_6 = arith.constant 0 : index
    %5 = vector.load %arg4[%c0_4, %c0_5, %c0_6] : memref<1x1x128xf32, #tpu.memory_space<vmem>>, vector<1x1x128xf32>
    %6 = vector.shape_cast %5 : vector<1x1x128xf32> to vector<1x128xf32>
    %7 = vector.broadcast %6 : vector<1x128xf32> to vector<8x128xf32>
    %8 = arith.addf %4, %7 : vector<8x128xf32>
    %cst_7 = arith.constant 0.000000e+00 : f32
    %9 = vector.broadcast %cst_7 : f32 to vector<8x128xf32>
    %10 = arith.maximumf %8, %9 : vector<8x128xf32>
    %11 = arith.truncf %10 : vector<8x128xf32> to vector<8x128xbf16>
    %c0_8 = arith.constant 0 : index
    %c0_9 = arith.constant 0 : index
    %12 = vector.load %arg10[%c0_8, %c0_9] : memref<8x128xbf16, #tpu.memory_space<vmem>>, vector<8x128xbf16>
    tpu.vector_store %arg10[%c0_8, %c0_9], %11 {strides = array<i32>} : memref<8x128xbf16, #tpu.memory_space<vmem>>, vector<8x128xbf16>,
    %c0_10 = arith.constant 0 : index
    %c0_11 = arith.constant 0 : index
    %13 = vector.load %arg10[%c0_10, %c0_11] : memref<8x128xbf16, #tpu.memory_space<vmem>>, vector<8x128xbf16>
    %c0_12 = arith.constant 0 : index
    %c0_13 = arith.constant 0 : index
    %c0_14 = arith.constant 0 : index
    %c0_15 = arith.constant 0 : index
    %14 = vector.load %arg5[%c0_12, %c0_13, %c0_14, %c0_15] : memref<1x2x128x128xbf16, #tpu.memory_space<vmem>>, vector<1x1x128x128xbf16>
    %15 = vector.shape_cast %14 : vector<1x1x128x128xbf16> to vector<128x128xbf16>
    %cst_16 = arith.constant dense<0.000000e+00> : vector<8x128xf32>
    %16 = tpu.matmul %13, %15, %cst_16 {dimension_numbers = #tpu.dot_dimension_numbers<[1], [0], [0], [1], [0, 0, 1, 1], [], []>} : vector<8x128xbf16>, vector<128x128xbf16>, vector<8x128xf32> -> vector<8x128xf32>
    %c0_17 = arith.constant 0 : index
    %c0_18 = arith.constant 0 : index
    %c0_19 = arith.constant 0 : index
    %c0_20 = arith.constant 0 : index
    %17 = vector.load %arg6[%c0_17, %c0_18, %c0_19, %c0_20] : memref<1x2x1x128xf32, #tpu.memory_space<vmem>>, vector<1x1x1x128xf32>
    %18 = vector.shape_cast %17 : vector<1x1x1x128xf32> to vector<1x128xf32>
    %19 = vector.broadcast %18 : vector<1x128xf32> to vector<8x128xf32>
    %20 = arith.addf %16, %19 : vector<8x128xf32>
    %cst_21 = arith.constant 0.000000e+00 : f32
    %21 = vector.broadcast %cst_21 : f32 to vector<8x128xf32>
    %22 = arith.maximumf %20, %21 : vector<8x128xf32>
    %23 = arith.truncf %22 : vector<8x128xf32> to vector<8x128xbf16>
    %c0_22 = arith.constant 0 : index
    %c0_23 = arith.constant 0 : index
    %24 = vector.load %arg10[%c0_22, %c0_23] : memref<8x128xbf16, #tpu.memory_space<vmem>>, vector<8x128xbf16>
    tpu.vector_store %arg10[%c0_22, %c0_23], %23 {strides = array<i32>} : memref<8x128xbf16, #tpu.memory_space<vmem>>, vector<8x128xbf16>,
    %c0_24 = arith.constant 0 : index
    %c0_25 = arith.constant 0 : index
    %25 = vector.load %arg10[%c0_24, %c0_25] : memref<8x128xbf16, #tpu.memory_space<vmem>>, vector<8x128xbf16>
    %c0_26 = arith.constant 0 : index
    %c1 = arith.constant 1 : index
    %c0_27 = arith.constant 0 : index
    %c0_28 = arith.constant 0 : index
    %26 = vector.load %arg5[%c0_26, %c1, %c0_27, %c0_28] : memref<1x2x128x128xbf16, #tpu.memory_space<vmem>>, vector<1x1x128x128xbf16>
    %27 = vector.shape_cast %26 : vector<1x1x128x128xbf16> to vector<128x128xbf16>
    %cst_29 = arith.constant dense<0.000000e+00> : vector<8x128xf32>
    %28 = tpu.matmul %25, %27, %cst_29 {dimension_numbers = #tpu.dot_dimension_numbers<[1], [0], [0], [1], [0, 0, 1, 1], [], []>} : vector<8x128xbf16>, vector<128x128xbf16>, vector<8x128xf32> -> vector<8x128xf32>
    %c0_30 = arith.constant 0 : index
    %c1_31 = arith.constant 1 : index
    %c0_32 = arith.constant 0 : index
    %c0_33 = arith.constant 0 : index
    %29 = vector.load %arg6[%c0_30, %c1_31, %c0_32, %c0_33] : memref<1x2x1x128xf32, #tpu.memory_space<vmem>>, vector<1x1x1x128xf32>
    %30 = vector.shape_cast %29 : vector<1x1x1x128xf32> to vector<1x128xf32>
    %31 = vector.broadcast %30 : vector<1x128xf32> to vector<8x128xf32>
    %32 = arith.addf %28, %31 : vector<8x128xf32>
    %cst_34 = arith.constant 0.000000e+00 : f32
    %33 = vector.broadcast %cst_34 : f32 to vector<8x128xf32>
    %34 = arith.maximumf %32, %33 : vector<8x128xf32>
    %35 = arith.truncf %34 : vector<8x128xf32> to vector<8x128xbf16>
    %c0_35 = arith.constant 0 : index
    %c0_36 = arith.constant 0 : index
    %36 = vector.load %arg10[%c0_35, %c0_36] : memref<8x128xbf16, #tpu.memory_space<vmem>>, vector<8x128xbf16>
    tpu.vector_store %arg10[%c0_35, %c0_36], %35 {strides = array<i32>} : memref<8x128xbf16, #tpu.memory_space<vmem>>, vector<8x128xbf16>,
    %c0_37 = arith.constant 0 : index
    %c0_38 = arith.constant 0 : index
    %37 = vector.load %arg10[%c0_37, %c0_38] : memref<8x128xbf16, #tpu.memory_space<vmem>>, vector<8x128xbf16>
    %c0_39 = arith.constant 0 : index
    %c0_40 = arith.constant 0 : index
    %c0_41 = arith.constant 0 : index
    %38 = vector.load %arg7[%c0_39, %c0_40, %c0_41] : memref<1x128x1xbf16, #tpu.memory_space<vmem>>, vector<1x128x1xbf16>
    %39 = vector.shape_cast %38 : vector<1x128x1xbf16> to vector<128x1xbf16>
    %cst_42 = arith.constant dense<0.000000e+00> : vector<8x1xf32>
    %40 = tpu.matmul %37, %39, %cst_42 {dimension_numbers = #tpu.dot_dimension_numbers<[1], [0], [0], [1], [0, 0, 1, 1], [], []>} : vector<8x128xbf16>, vector<128x1xbf16>, vector<8x1xf32> -> vector<8x1xf32>
    %41 = tpu.transpose %40, [1, 0] : vector<8x1xf32> -> vector<1x8xf32>
    %42 = arith.index_cast %arg0 : i32 to index
    %43 = memref.load %arg8[%42] : memref<3xf32, #tpu.memory_space<smem>>
    %44 = vector.broadcast %43 : f32 to vector<1x8xf32>
    %45 = arith.addf %41, %44 : vector<1x8xf32>
    %c0_43 = arith.constant 0 : index
    %c0_44 = arith.constant 0 : index
    %c0_45 = arith.constant 0 : index
    %46 = vector.load %arg9[%c0_43, %c0_44, %c0_45] : memref<1x1x8xf32, #tpu.memory_space<vmem>>, vector<1x1x8xf32>
    %47 = vector.shape_cast %46 : vector<1x1x8xf32> to vector<1x8xf32>
    %48 = vector.shape_cast %45 : vector<1x8xf32> to vector<1x1x8xf32>
    tpu.vector_store %arg9[%c0_43, %c0_44, %c0_45], %48 {strides = array<i32>} : memref<1x1x8xf32, #tpu.memory_space<vmem>>, vector<1x1x8xf32>,
    return
  }
  func.func @transform_0(%arg0: i32, %arg1: i32) -> (i32, i32) {
    %c0_i32 = arith.constant 0 : i32
    %c0_i32_0 = arith.constant 0 : i32
    return %arg1, %c0_i32 : i32, i32
  }
  func.func @transform_1(%arg0: i32, %arg1: i32) -> (i32, i32, i32) {
    %c0_i32 = arith.constant 0 : i32
    %c0_i32_0 = arith.constant 0 : i32
    %c0_i32_1 = arith.constant 0 : i32
    return %arg0, %c0_i32, %c0_i32_0 : i32, i32, i32
  }
  func.func @transform_2(%arg0: i32, %arg1: i32) -> (i32, i32, i32) {
    %c0_i32 = arith.constant 0 : i32
    %c0_i32_0 = arith.constant 0 : i32
    %c0_i32_1 = arith.constant 0 : i32
    return %arg0, %c0_i32, %c0_i32_0 : i32, i32, i32
  }
  func.func @transform_3(%arg0: i32, %arg1: i32) -> (i32, i32, i32, i32) {
    %c0_i32 = arith.constant 0 : i32
    %c0_i32_0 = arith.constant 0 : i32
    %c0_i32_1 = arith.constant 0 : i32
    %c0_i32_2 = arith.constant 0 : i32
    return %arg0, %c0_i32, %c0_i32_0, %c0_i32_1 : i32, i32, i32, i32
  }
  func.func @transform_4(%arg0: i32, %arg1: i32) -> (i32, i32, i32, i32) {
    %c0_i32 = arith.constant 0 : i32
    %c0_i32_0 = arith.constant 0 : i32
    %c0_i32_1 = arith.constant 0 : i32
    %c0_i32_2 = arith.constant 0 : i32
    return %arg0, %c0_i32, %c0_i32_0, %c0_i32_1 : i32, i32, i32, i32
  }
  func.func @transform_5(%arg0: i32, %arg1: i32) -> (i32, i32, i32) {
    %c0_i32 = arith.constant 0 : i32
    %c0_i32_0 = arith.constant 0 : i32
    %c0_i32_1 = arith.constant 0 : i32
    return %arg0, %c0_i32, %c0_i32_0 : i32, i32, i32
  }
  func.func @transform_6(%arg0: i32, %arg1: i32) -> i32 {
    %c0_i32 = arith.constant 0 : i32
    %c0_i32_0 = arith.constant 0 : i32
    return %c0_i32 : i32
  }
  func.func @transform_7(%arg0: i32, %arg1: i32) -> (i32, i32, i32) {
    %c0_i32 = arith.constant 0 : i32
    %c0_i32_0 = arith.constant 0 : i32
    return %arg0, %c0_i32, %arg1 : i32, i32, i32
  }
}

</mosaic_0001>

<llo_original>
// kernel: tpu_custom_call.1
$region0: #{tpu_custom_call.1}
  #allocation0 [shape = 'u32[]', space=smem, size = 0x4, offset = 0x4, fixed_abs, tag = 'smem constant byte address 0x4 - core index']
  #allocation1 [shape = 'u32[144,128]{1,0:T(1,128)}', space=vmem, size = 0x12000, scoped, tag = 'internal scratch']
  #allocation2 [shape = 'bf16[8,128]{1,0:T(8,128)(2,1)}', space=vmem, size = 0x800, scoped, tag = 'scratch operand']
  %s0 = inlined_call_operand.vmem [shape: f32[8,15], index: 0, kind: input, shape index: {}]
  %s1 = inlined_call_operand.vmem [shape: bf16[3,15,128], index: 1, kind: input, shape index: {}]
  %s2 = inlined_call_operand.vmem [shape: f32[3,1,128], index: 2, kind: input, shape index: {}]
  %s3 = inlined_call_operand.hbm [shape: bf16[3,2,128,128], index: 3, kind: input, shape index: {}]
  %s4 = inlined_call_operand.vmem [shape: f32[3,2,1,128], index: 4, kind: input, shape index: {}]
  %s5 = inlined_call_operand.vmem [shape: bf16[3,128,1], index: 5, kind: input, shape index: {}]
  %s6 = inlined_call_operand.vmem [shape: f32[3], index: 6, kind: input, shape index: {}]
  %s7 = inlined_call_operand.hbm [shape: f32[3,1,8], index: 7, kind: output, shape index: {}]
  %s8 = sld [smem:[#allocation0]]
  $region69: #{tpu_custom_call.1} parent=0
    _
  %s10 = ssub.s32 1, %s8
  %s11 = scalar_select 0, %s10, %s8
  $region1: #{tpu_custom_call.1} parent=0
    #allocation3 [shape = 'u8[131072]{0}', space=vmem, size = 0x20000, scoped, tag = 'input window, operand 3']
    #allocation4 [shape = 's32[2]{0}', space=sflag, size = 0x8, scoped, tag = 'scoped memory for tpu_custom_call.1']
    #allocation5 [shape = 's32[2]{0}', space=sflag, size = 0x8, scoped, tag = 'scoped memory for tpu_custom_call.1']
    #allocation6 [shape = 's32[2]{0}', space=sflag, size = 0x8, scoped, tag = 'scoped memory for tpu_custom_call.1']
    #allocation7 [shape = 'u8[512]{0}', space=smem, size = 0x200, scoped, tag = 'input window, operand 6, single buffered']
    #allocation8 [shape = 'u8[1024]{0}', space=vmem, size = 0x400, scoped, tag = 'output window, operand 0']
    %12 = vsyncpa [#allocation4], 0
    %s13 = scalar_lea.sflag [#allocation4], 1
    %14 = vsyncpa %s13, 0
    %15 = vsyncpa [#allocation6], 0
    %16 = vsyncpa [#allocation5], 0
    %s17 = scalar_lea.sflag [#allocation5], 1
    %18 = vsyncpa %s17, 0
    loop: start=0, step=1, limit=5
    $region2: #{tpu_custom_call.1} parent=1 // loop_pre_header
      _
    $region3: #{tpu_custom_call.1} parent=1 // loop_header
      %s20 = sphi 0, %s24
      %p21 = scmp.ge.s32.totalorder %s20, 5
      %s27 = sphi 0, %s39
      %s28 = sphi 0, %s35
      %s29 = sphi 0, %s27
      %s30 = sphi 0, %s28
      %s31 = sphi 0, %s29
      %s32 = sphi 0, %s30
      %s42 = sphi 0, %s44
      %s45 = sphi 0, %s42
      %s46 = sphi 0, %s45
      %s62 = sphi 0, %s46
      %s68 = sphi 0, %s70
      %s71 = sphi 0, %s68
      %s72 = sphi 0, %s71
      %s88 = sphi 0, %s72
      %s94 = sphi 0, %s96
      %s97 = sphi 0, %s94
      %s98 = sphi 0, %s97
      %s114 = sphi 0, %s98
      %s120 = sphi 0, %s122
      %s123 = sphi 0, %s120
      %s124 = sphi 0, %s123
      %s140 = sphi 0, %s124
      %s146 = sphi 0, %s148
      %s149 = sphi 0, %s146
      %s150 = sphi 0, %s149
      %s166 = sphi 0, %s150
      %s172 = sphi 0, %s174
      %s175 = sphi 0, %s172
      %s176 = sphi 0, %s175
      %s192 = sphi 0, %s176
      %s196 = sphi 0, %s196
      %s198 = sphi 0, %s196
      %s199 = sphi 0, %s198
      %s213 = sphi 0, %s199
      %s221 = sphi 0, %s223
      %s224 = sphi 0, %s221
      %s225 = sphi 0, %s224
      %s241 = sphi 0, %s225
    $region4: #{tpu_custom_call.1} parent=1 // loop_header_branch
      %23 = sbr.rel (%p21) target = $region8
    $region5: #{tpu_custom_call.1} parent=1 // loop_body
      %s25 = ssub.s32 %s20, 1
      %s26 = ssub.s32 %s20, 2
      %s33 = sadd.s32 1, %s28
      %p34 = scmp.ge.s32.totalorder %s33, 1
      %s35 = scalar_select %p34, 0, %s33
      %s36 = sadd.s32 1, %s27
      %s37 = scalar_select %p34, %s36, %s27
      %p38 = scmp.ge.s32.totalorder %s37, 3
      %s39 = scalar_select %p38, 0, %s37
      %s40 = ssub.s32 %s28, %s35
      %p41 = scmp.eq.s32.totalorder %s40, 0
      %s43 = sadd.s32 %s42, 1
      %s44 = scalar_select %p41, %s42, %s43
      %p47 = pneg %p41
      %p48 = scmp.eq.s32.totalorder %s20, 2
      %p49 = por %p47, %p48
      %p50 = scmp.ne.s32.totalorder %s42, %s45
      %p51 = scmp.eq.s32.totalorder %s20, 0
      %p52 = por %p50, %p51
      %p53 = scmp.ne.s32.totalorder %s42, %s45
      %p54 = scmp.eq.s32.totalorder %s25, 2
      %p55 = por %p53, %p54
      %p56 = scmp.ne.s32.totalorder %s45, %s46
      %p57 = scmp.eq.s32.totalorder %s25, 0
      %p58 = por %p56, %p57
      %p59 = scmp.ne.s32.totalorder %s45, %s46
      %p60 = scmp.eq.s32.totalorder %s26, 2
      %p61 = por %p59, %p60
      %p63 = scmp.ne.s32.totalorder %s46, %s62
      %p64 = scmp.eq.s32.totalorder %s26, 0
      %p65 = por %p63, %p64
      %s66 = ssub.s32 %s27, %s39
      %p67 = scmp.eq.s32.totalorder %s66, 0
      %s69 = sadd.s32 %s68, 1
      %s70 = scalar_select %p67, %s68, %s69
      %p73 = pneg %p67
      %p74 = scmp.eq.s32.totalorder %s20, 2
      %p75 = por %p73, %p74
      %p76 = scmp.ne.s32.totalorder %s68, %s71
      %p77 = scmp.eq.s32.totalorder %s20, 0
      %p78 = por %p76, %p77
      %p79 = scmp.ne.s32.totalorder %s68, %s71
      %p80 = scmp.eq.s32.totalorder %s25, 2
      %p81 = por %p79, %p80
      %p82 = scmp.ne.s32.totalorder %s71, %s72
      %p83 = scmp.eq.s32.totalorder %s25, 0
      %p84 = por %p82, %p83
      %p85 = scmp.ne.s32.totalorder %s71, %s72
      %p86 = scmp.eq.s32.totalorder %s26, 2
      %p87 = por %p85, %p86
      %p89 = scmp.ne.s32.totalorder %s72, %s88
      %p90 = scmp.eq.s32.totalorder %s26, 0
      %p91 = por %p89, %p90
      %s92 = ssub.s32 %s27, %s39
      %p93 = scmp.eq.s32.totalorder %s92, 0
      %s95 = sadd.s32 %s94, 1
      %s96 = scalar_select %p93, %s94, %s95
      %p99 = pneg %p93
      %p100 = scmp.eq.s32.totalorder %s20, 2
      %p101 = por %p99, %p100
      %p102 = scmp.ne.s32.totalorder %s94, %s97
      %p103 = scmp.eq.s32.totalorder %s20, 0
      %p104 = por %p102, %p103
      %p105 = scmp.ne.s32.totalorder %s94, %s97
      %p106 = scmp.eq.s32.totalorder %s25, 2
      %p107 = por %p105, %p106
      %p108 = scmp.ne.s32.totalorder %s97, %s98
      %p109 = scmp.eq.s32.totalorder %s25, 0
      %p110 = por %p108, %p109
      %p111 = scmp.ne.s32.totalorder %s97, %s98
      %p112 = scmp.eq.s32.totalorder %s26, 2
      %p113 = por %p111, %p112
      %p115 = scmp.ne.s32.totalorder %s98, %s114
      %p116 = scmp.eq.s32.totalorder %s26, 0
      %p117 = por %p115, %p116
      %s118 = ssub.s32 %s27, %s39
      %p119 = scmp.eq.s32.totalorder %s118, 0
      %s121 = sadd.s32 %s120, 1
      %s122 = scalar_select %p119, %s120, %s121
      %p125 = pneg %p119
      %p126 = scmp.eq.s32.totalorder %s20, 2
      %p127 = por %p125, %p126
      %p128 = scmp.ne.s32.totalorder %s120, %s123
      %p129 = scmp.eq.s32.totalorder %s20, 0
      %p130 = por %p128, %p129
      %p131 = scmp.ne.s32.totalorder %s120, %s123
      %p132 = scmp.eq.s32.totalorder %s25, 2
      %p133 = por %p131, %p132
      %p134 = scmp.ne.s32.totalorder %s123, %s124
      %p135 = scmp.eq.s32.totalorder %s25, 0
      %p136 = por %p134, %p135
      %p137 = scmp.ne.s32.totalorder %s123, %s124
      %p138 = scmp.eq.s32.totalorder %s26, 2
      %p139 = por %p137, %p138
      %p141 = scmp.ne.s32.totalorder %s124, %s140
      %p142 = scmp.eq.s32.totalorder %s26, 0
      %p143 = por %p141, %p142
      %s144 = ssub.s32 %s27, %s39
      %p145 = scmp.eq.s32.totalorder %s144, 0
      %s147 = sadd.s32 %s146, 1
      %s148 = scalar_select %p145, %s146, %s147
      %p151 = pneg %p145
      %p152 = scmp.eq.s32.totalorder %s20, 2
      %p153 = por %p151, %p152
      %p154 = scmp.ne.s32.totalorder %s146, %s149
      %p155 = scmp.eq.s32.totalorder %s20, 0
      %p156 = por %p154, %p155
      %p157 = scmp.ne.s32.totalorder %s146, %s149
      %p158 = scmp.eq.s32.totalorder %s25, 2
      %p159 = por %p157, %p158
      %p160 = scmp.ne.s32.totalorder %s149, %s150
      %p161 = scmp.eq.s32.totalorder %s25, 0
      %p162 = por %p160, %p161
      %p163 = scmp.ne.s32.totalorder %s149, %s150
      %p164 = scmp.eq.s32.totalorder %s26, 2
      %p165 = por %p163, %p164
      %p167 = scmp.ne.s32.totalorder %s150, %s166
      %p168 = scmp.eq.s32.totalorder %s26, 0
      %p169 = por %p167, %p168
      %s170 = ssub.s32 %s27, %s39
      %p171 = scmp.eq.s32.totalorder %s170, 0
      %s173 = sadd.s32 %s172, 1
      %s174 = scalar_select %p171, %s172, %s173
      %p177 = pneg %p171
      %p178 = scmp.eq.s32.totalorder %s20, 2
      %p179 = por %p177, %p178
      %p180 = scmp.ne.s32.totalorder %s172, %s175
      %p181 = scmp.eq.s32.totalorder %s20, 0
      %p182 = por %p180, %p181
      %p183 = scmp.ne.s32.totalorder %s172, %s175
      %p184 = scmp.eq.s32.totalorder %s25, 2
      %p185 = por %p183, %p184
      %p186 = scmp.ne.s32.totalorder %s175, %s176
      %p187 = scmp.eq.s32.totalorder %s25, 0
      %p188 = por %p186, %p187
      %p189 = scmp.ne.s32.totalorder %s175, %s176
      %p190 = scmp.eq.s32.totalorder %s26, 2
      %p191 = por %p189, %p190
      %p193 = scmp.ne.s32.totalorder %s176, %s192
      %p194 = scmp.eq.s32.totalorder %s26, 0
      %p195 = por %p193, %p194
      %s197 = sadd.s32 %s196, 1
      %p200 = scmp.eq.s32.totalorder %s20, 2
      %p201 = scmp.ne.s32.totalorder %s196, %s198
      %p202 = scmp.eq.s32.totalorder %s20, 0
      %p203 = por %p201, %p202
      %p204 = scmp.ne.s32.totalorder %s196, %s198
      %p205 = scmp.eq.s32.totalorder %s25, 2
      %p206 = por %p204, %p205
      %p207 = scmp.ne.s32.totalorder %s198, %s199
      %p208 = scmp.eq.s32.totalorder %s25, 0
      %p209 = por %p207, %p208
      %p210 = scmp.ne.s32.totalorder %s198, %s199
      %p211 = scmp.eq.s32.totalorder %s26, 2
      %p212 = por %p210, %p211
      %p214 = scmp.ne.s32.totalorder %s199, %s213
      %p215 = scmp.eq.s32.totalorder %s26, 0
      %p216 = por %p214, %p215
      %s217 = ssub.s32 %s27, %s39
      %s218 = ssub.s32 %s28, %s35
      %s219 = sor.u32 %s217, %s218
      %p220 = scmp.eq.s32.totalorder %s219, 0
      %s222 = sadd.s32 %s221, 1
      %s223 = scalar_select %p220, %s221, %s222
      %p226 = pneg %p220
      %p227 = scmp.eq.s32.totalorder %s20, 2
      %p228 = por %p226, %p227
      %p229 = scmp.ne.s32.totalorder %s221, %s224
      %p230 = scmp.eq.s32.totalorder %s20, 0
      %p231 = por %p229, %p230
      %p232 = scmp.ne.s32.totalorder %s221, %s224
      %p233 = scmp.eq.s32.totalorder %s25, 2
      %p234 = por %p232, %p233
      %p235 = scmp.ne.s32.totalorder %s224, %s225
      %p236 = scmp.eq.s32.totalorder %s25, 0
      %p237 = por %p235, %p236
      %p238 = scmp.ne.s32.totalorder %s224, %s225
      %p239 = scmp.eq.s32.totalorder %s26, 2
      %p240 = por %p238, %p239
      %p242 = scmp.ne.s32.totalorder %s225, %s241
      %p243 = scmp.eq.s32.totalorder %s26, 0
      %p244 = por %p242, %p243
      %p245 = scmp.le.s32.totalorder 1, %s20
      %p246 = scmp.lt.s32.totalorder %s20, 4
      %p247 = pnand %p245, %p246
      %p248 = pneg %p247
      // Predicated region
      $region9: #{tpu_custom_call.1} parent=5 // pred_check
        _
      $region10: #{tpu_custom_call.1} parent=5 // pred_check_branch
        %250 = sbr.rel (%p247) target = $region12
      $region11: #{tpu_custom_call.1} parent=5 // pred_region
        %s251 = ssub.s32 %s20, 1
        // Predicated region
        $region13: #{tpu_custom_call.1} parent=11 // pred_check
          %p252 = pneg %p58
        $region14: #{tpu_custom_call.1} parent=11 // pred_check_branch
          %254 = sbr.rel (%p252) target = $region16
        $region15: #{tpu_custom_call.1} parent=11 // pred_region
          %p255 = scmp.lt.s32.totalorder %s30, 0
          %s256 = scalar_select %p255, %s30, 0
          %s257 = smul.addr %s256, 8
          %s258 = scalar_lea.vmem %s0, %s257
        $region16: #{tpu_custom_call.1} parent=11 // pred_fallthru
          _
        // Predicated region
        $region17: #{tpu_custom_call.1} parent=11 // pred_check
          %p259 = pneg %p209
        $region18: #{tpu_custom_call.1} parent=11 // pred_check_branch
          %261 = sbr.rel (%p259) target = $region20
        $region19: #{tpu_custom_call.1} parent=11 // pred_region
          %s263 = ssub.s32 16, 16
          %264 = vsyncadd [#allocation6], %s263
          %s266 = sshll.u32 %s6, 4
          %s267 = int_to_ptr.vmem [resolvable:$true] %s266
          %269 = dma.vmem_to_smem %s267, 16, [#allocation7], [#allocation6]
        $region20: #{tpu_custom_call.1} parent=11 // pred_fallthru
          _
      $region12: #{tpu_custom_call.1} parent=5 // pred_fallthru
        _
      %p270 = scmp.lt.s32.totalorder %s20, 3
      // Predicated region
      $region21: #{tpu_custom_call.1} parent=5 // pred_check
        %p271 = pneg %p270
      $region22: #{tpu_custom_call.1} parent=5 // pred_check_branch
        %273 = sbr.rel (%p271) target = $region24
      $region23: #{tpu_custom_call.1} parent=5 // pred_region
        // Predicated region
        $region25: #{tpu_custom_call.1} parent=23 // pred_check
          %p274 = pneg %p78
        $region26: #{tpu_custom_call.1} parent=23 // pred_check_branch
          %276 = sbr.rel (%p274) target = $region28
        $region27: #{tpu_custom_call.1} parent=23 // pred_region
          %p277 = scmp.lt.s32.totalorder %s27, 2
          %s278 = scalar_select %p277, %s27, 2
          %s279 = smul.addr %s278, 2
          %s280 = smul.addr %s279, 4
          %s281 = scalar_lea.vmem %s1, %s280
        $region28: #{tpu_custom_call.1} parent=23 // pred_fallthru
          _
        // Predicated region
        $region29: #{tpu_custom_call.1} parent=23 // pred_check
          %p282 = pneg %p104
        $region30: #{tpu_custom_call.1} parent=23 // pred_check_branch
          %284 = sbr.rel (%p282) target = $region32
        $region31: #{tpu_custom_call.1} parent=23 // pred_region
          %p285 = scmp.lt.s32.totalorder %s27, 2
          %s286 = scalar_select %p285, %s27, 2
          %s287 = scalar_lea.vmem %s2, %s286
        $region32: #{tpu_custom_call.1} parent=23 // pred_fallthru
          _
        // Predicated region
        $region33: #{tpu_custom_call.1} parent=23 // pred_check
          %p288 = pneg %p130
        $region34: #{tpu_custom_call.1} parent=23 // pred_check_branch
          %290 = sbr.rel (%p288) target = $region36
        $region35: #{tpu_custom_call.1} parent=23 // pred_region
          %s291 = sand.u32 %s120, 1
          %s292 = scalar_lea.sflag [#allocation4], %s291
          %s293 = sand.u32 %s120, 1
          %s294 = smul.addr %s293, 128
          %s295 = scalar_lea.vmem [#allocation3], %s294
          %s297 = ssub.s32 2048, 2048
          %298 = vsyncadd %s292, %s297
          %s299 = smul.addr %s27, 32
          %s300 = smul.addr %s299, 64
          %s301 = scalar_lea.hbm %s3, %s300
          %s302 = sshll.u32 %s295, 4
          %s303 = int_to_ptr.vmem [resolvable:$true] %s302
          %308 = dma.hbm_to_vmem [thread:$0]  %s301, 2048, %s303, %s292, 64, 64, 4
        $region36: #{tpu_custom_call.1} parent=23 // pred_fallthru
          _
        // Predicated region
        $region37: #{tpu_custom_call.1} parent=23 // pred_check
          %p309 = pneg %p156
        $region38: #{tpu_custom_call.1} parent=23 // pred_check_branch
          %311 = sbr.rel (%p309) target = $region40
        $region39: #{tpu_custom_call.1} parent=23 // pred_region
          %p312 = scmp.lt.s32.totalorder %s27, 2
          %s313 = scalar_select %p312, %s27, 2
          %s314 = smul.addr %s313, 2
          %s315 = scalar_lea.vmem %s4, %s314
        $region40: #{tpu_custom_call.1} parent=23 // pred_fallthru
          _
        // Predicated region
        $region41: #{tpu_custom_call.1} parent=23 // pred_check
          %p316 = pneg %p182
        $region42: #{tpu_custom_call.1} parent=23 // pred_check_branch
          %318 = sbr.rel (%p316) target = $region44
        $region43: #{tpu_custom_call.1} parent=23 // pred_region
          %p319 = scmp.lt.s32.totalorder %s27, 2
          %s320 = scalar_select %p319, %s27, 2
          %s321 = smul.addr %s320, 16
          %s322 = smul.addr %s321, 4
          %s323 = scalar_lea.vmem %s5, %s322
        $region44: #{tpu_custom_call.1} parent=23 // pred_fallthru
          _
      $region24: #{tpu_custom_call.1} parent=5 // pred_fallthru
        _
      %p324 = scmp.le.s32.totalorder 1, %s20
      %p325 = scmp.lt.s32.totalorder %s20, 4
      %p326 = pnand %p324, %p325
      %p327 = pneg %p326
      // Predicated region
      $region45: #{tpu_custom_call.1} parent=5 // pred_check
        _
      $region46: #{tpu_custom_call.1} parent=5 // pred_check_branch
        %329 = sbr.rel (%p326) target = $region48
      $region47: #{tpu_custom_call.1} parent=5 // pred_region
        %s330 = ssub.s32 %s20, 1
        %s331 = sand.u32 %s123, 1
        %s332 = scalar_lea.sflag [#allocation4], %s331
        %s333 = sand.u32 %s123, 1
        %s334 = smul.addr %s333, 128
        %s335 = scalar_lea.vmem [#allocation3], %s334
        // Predicated region
        $region49: #{tpu_custom_call.1} parent=47 // pred_check
          %p336 = pneg %p136
        $region50: #{tpu_custom_call.1} parent=47 // pred_check_branch
          %338 = sbr.rel (%p336) target = $region52
        $region51: #{tpu_custom_call.1} parent=47 // pred_region
          %339 = dma.done %s332, 2048
        $region52: #{tpu_custom_call.1} parent=47 // pred_fallthru
          _
        // Predicated region
        $region53: #{tpu_custom_call.1} parent=47 // pred_check
          %p340 = pneg %p209
        $region54: #{tpu_custom_call.1} parent=47 // pred_check_branch
          %342 = sbr.rel (%p340) target = $region56
        $region55: #{tpu_custom_call.1} parent=47 // pred_region
          %343 = dma.done [#allocation6], 16
        $region56: #{tpu_custom_call.1} parent=47 // pred_fallthru
          _
        %344 = sfence
        %p345 = scmp.lt.s32.totalorder %s30, 0
        %s346 = scalar_select %p345, %s30, 0
        %s347 = smul.addr %s346, 8
        %s348 = scalar_lea.vmem %s0, %s347
        %p349 = pneg %p58
        %p350 = pneg %p55
        %p351 = scmp.lt.s32.totalorder %s29, 2
        %s352 = scalar_select %p351, %s29, 2
        %s353 = smul.addr %s352, 2
        %s354 = smul.addr %s353, 4
        %s355 = scalar_lea.vmem %s1, %s354
        %p356 = pneg %p84
        %p357 = pneg %p81
        %p358 = scmp.lt.s32.totalorder %s29, 2
        %s359 = scalar_select %p358, %s29, 2
        %s360 = scalar_lea.vmem %s2, %s359
        %p361 = pneg %p110
        %p362 = pneg %p107
        %s363 = sand.u32 %s123, 1
        %s364 = scalar_lea.sflag [#allocation4], %s363
        %s365 = sand.u32 %s123, 1
        %s366 = smul.addr %s365, 128
        %s367 = scalar_lea.vmem [#allocation3], %s366
        %p368 = pneg %p136
        %p369 = pneg %p133
        %p370 = scmp.lt.s32.totalorder %s29, 2
        %s371 = scalar_select %p370, %s29, 2
        %s372 = smul.addr %s371, 2
        %s373 = scalar_lea.vmem %s4, %s372
        %p374 = pneg %p162
        %p375 = pneg %p159
        %p376 = scmp.lt.s32.totalorder %s29, 2
        %s377 = scalar_select %p376, %s29, 2
        %s378 = smul.addr %s377, 16
        %s379 = smul.addr %s378, 4
        %s380 = scalar_lea.vmem %s5, %s379
        %p381 = pneg %p188
        %p382 = pneg %p185
        %p383 = pneg %p209
        %p384 = pneg %p206
        %p385 = pneg %p237
        %p386 = pneg %p234
        %s387 = sand.u32 %s224, 1
        %s388 = scalar_lea.sflag [#allocation5], %s387
        %s389 = sand.u32 %s224, 1
        %s390 = scalar_lea.vmem [#allocation8], %s389
        %p391 = scmp.lt.s32.totalorder %s30, 0
        %s392 = scalar_select %p391, %s30, 0
        %s393 = smul.addr %s392, 8
        %s394 = scalar_lea.vmem %s0, %s393
        %p395 = scmp.lt.s32.totalorder %s29, 2
        %s396 = scalar_select %p395, %s29, 2
        %s397 = smul.addr %s396, 2
        %s398 = smul.addr %s397, 4
        %s399 = scalar_lea.vmem %s1, %s398
        %p400 = scmp.lt.s32.totalorder %s29, 2
        %s401 = scalar_select %p400, %s29, 2
        %s402 = scalar_lea.vmem %s2, %s401
        %p403 = scmp.lt.s32.totalorder %s29, 2
        %s404 = scalar_select %p403, %s29, 2
        %s405 = smul.addr %s404, 2
        %s406 = scalar_lea.vmem %s4, %s405
        %p407 = scmp.lt.s32.totalorder %s29, 2
        %s408 = scalar_select %p407, %s29, 2
        %s409 = smul.addr %s408, 16
        %s410 = smul.addr %s409, 4
        %s411 = scalar_lea.vmem %s5, %s410
        %v413 = vld [vmem:[%s394] sm:$0xff]
        %v414 = vpack.c.bf16 %v413, %v413
        %v415 = vld [vmem:[%s399] sm:$0xf]
        %v416 = vld [vmem:[%s399 + $0x4] sm:$0xf]
        %v417 = vld [vmem:[%s402] sm:$0x1]
        %v419 = vlaneseq
        %v420 = vshrl.u32 %v419, 7
        %v421 = vsub.s32 0, %v420
        %v422 = vrot.slane %v417, %v421
        %v426 = vunpack.c.l.b16 %v415
        %v427 = vunpack.c.l.b16 %v416
        %v428 = vpack.c.b16 %v427, %v426
        %vm429 = vcmask 121856
        %v431 = vsel %vm429, %v414, 0
        %vm433 = vcmask 1046528
        %vm434 = vcmask 1047552
        %v435 = vsel %vm433, 4294967295, 65535
        %v436 = vsel %vm434, %v435, 0
        %v438 = vand.u32 %v428, %v436
        %440 = vmatprep.subr.bf16.mxu0 0
        %441 = vmatpush1.bf16.msra.mxu0 %v438
        %442 = vmatprep.subr.bf16.mxu0 0
        %443 = vmatpush1.bf16.msra.mxu0 0
        %444 = vmatprep.subr.bf16.mxu0 0
        %445 = vmatpush1.bf16.msra.mxu0 0
        %446 = vmatprep.subr.bf16.mxu0 0
        %447 = vmatpush1.bf16.msra.mxu0 0
        %448 = vmatprep.subr.bf16.mxu0 0
        %449 = vmatpush1.bf16.msra.mxu0 0
        %450 = vmatprep.subr.bf16.mxu0 0
        %451 = vmatpush1.bf16.msra.mxu0 0
        %452 = vmatprep.subr.bf16.mxu0 0
        %453 = vmatpush1.bf16.msra.mxu0 0
        %454 = vmatprep.subr.bf16.mxu0 0
        %455 = vmatpush1.bf16.msra.mxu0 0
        %456 = vmatprep.subr.bf16.mxu0 0
        %457 = vmatpush1.bf16.msra.mxu0 0
        %458 = vmatprep.subr.bf16.mxu0 0
        %459 = vmatpush1.bf16.msra.mxu0 0
        %460 = vmatprep.subr.bf16.mxu0 0
        %461 = vmatpush1.bf16.msra.mxu0 0
        %462 = vmatprep.subr.bf16.mxu0 0
        %463 = vmatpush1.bf16.msra.mxu0 0
        %464 = vmatprep.subr.bf16.mxu0 0
        %465 = vmatpush1.bf16.msra.mxu0 0
        %466 = vmatprep.subr.bf16.mxu0 0
        %467 = vmatpush1.bf16.msra.mxu0 0
        %468 = vmatprep.subr.bf16.mxu0 0
        %469 = vmatpush1.bf16.msra.mxu0 0
        %470 = vmatprep.subr.bf16.mxu0 0
        %471 = vmatpush1.bf16.msra.mxu0 0
        %472 = vmatprep.mubr.bf16.mxu0 0
        %473 = vmatmul.mubr.bf16.gmra.mrb[0].mxu0 %v431
        %v474 = vpop.f32.mrb[0].mxu0
        %v475 = vadd.f32 %v422, %v474
        %v476 = vpop.f32.mrb[0].mxu0
        %v477 = vpop.f32.mrb[0].mxu0
        %v478 = vpop.f32.mrb[0].mxu0
        %479 = vdwg.mxu0
        %v480 = vmax.f32 %v475, 0.0
        %v481 = vpack.c.bf16 %v480, %v480
        %482 = vst [vmem:[#allocation2] sm:$0xf] %v481
        %v483 = vld [vmem:[#allocation2] sm:$0xf]
        %v484 = vld [vmem:[%s335] sm:$0xf]
        %v485 = vld [vmem:[%s335 + $0x4] sm:$0xf]
        %v486 = vld [vmem:[%s335 + $0x8] sm:$0xf]
        %v487 = vld [vmem:[%s335 + $0xc] sm:$0xf]
        %v488 = vld [vmem:[%s335 + $0x10] sm:$0xf]
        %v489 = vld [vmem:[%s335 + $0x14] sm:$0xf]
        %v490 = vld [vmem:[%s335 + $0x18] sm:$0xf]
        %v491 = vld [vmem:[%s335 + $0x1c] sm:$0xf]
        %v492 = vld [vmem:[%s335 + $0x20] sm:$0xf]
        %v493 = vld [vmem:[%s335 + $0x24] sm:$0xf]
        %v494 = vld [vmem:[%s335 + $0x28] sm:$0xf]
        %v495 = vld [vmem:[%s335 + $0x2c] sm:$0xf]
        %v496 = vld [vmem:[%s335 + $0x30] sm:$0xf]
        %v497 = vld [vmem:[%s335 + $0x34] sm:$0xf]
        %v498 = vld [vmem:[%s335 + $0x38] sm:$0xf]
        %v499 = vld [vmem:[%s335 + $0x3c] sm:$0xf]
        %v500 = vld [vmem:[%s406] sm:$0x1]
        %v502 = vlaneseq
        %v503 = vshrl.u32 %v502, 7
        %v504 = vsub.s32 0, %v503
        %v505 = vrot.slane %v500, %v504
        %v523 = vunpack.c.l.b16 %v484
        %v524 = vunpack.c.l.b16 %v485
        %v525 = vunpack.c.l.b16 %v486
        %v526 = vunpack.c.l.b16 %v487
        %v527 = vunpack.c.l.b16 %v488
        %v528 = vunpack.c.l.b16 %v489
        %v529 = vunpack.c.l.b16 %v490
        %v530 = vunpack.c.l.b16 %v491
        %v531 = vunpack.c.l.b16 %v492
        %v532 = vunpack.c.l.b16 %v493
        %v533 = vunpack.c.l.b16 %v494
        %v534 = vunpack.c.l.b16 %v495
        %v535 = vunpack.c.l.b16 %v496
        %v536 = vunpack.c.l.b16 %v497
        %v537 = vunpack.c.l.b16 %v498
        %v538 = vunpack.c.l.b16 %v499
        %v539 = vpack.c.b16 %v524, %v523
        %v540 = vpack.c.b16 %v526, %v525
        %v541 = vpack.c.b16 %v528, %v527
        %v542 = vpack.c.b16 %v530, %v529
        %v543 = vpack.c.b16 %v532, %v531
        %v544 = vpack.c.b16 %v534, %v533
        %v545 = vpack.c.b16 %v536, %v535
        %v546 = vpack.c.b16 %v538, %v537
        %555 = vmatprep.subr.bf16.mxu0 0
        %556 = vmatpush1.bf16.msra.mxu0 %v539
        %557 = vmatprep.subr.bf16.mxu0 0
        %558 = vmatpush1.bf16.msra.mxu0 %v540
        %559 = vmatprep.subr.bf16.mxu0 0
        %560 = vmatpush1.bf16.msra.mxu0 %v541
        %561 = vmatprep.subr.bf16.mxu0 0
        %562 = vmatpush1.bf16.msra.mxu0 %v542
        %563 = vmatprep.subr.bf16.mxu0 0
        %564 = vmatpush1.bf16.msra.mxu0 %v543
        %565 = vmatprep.subr.bf16.mxu0 0
        %566 = vmatpush1.bf16.msra.mxu0 %v544
        %567 = vmatprep.subr.bf16.mxu0 0
        %568 = vmatpush1.bf16.msra.mxu0 %v545
        %569 = vmatprep.subr.bf16.mxu0 0
        %570 = vmatpush1.bf16.msra.mxu0 %v546
        %571 = vmatprep.subr.bf16.mxu0 0
        %572 = vmatpush1.bf16.msra.mxu0 0
        %573 = vmatprep.subr.bf16.mxu0 0
        %574 = vmatpush1.bf16.msra.mxu0 0
        %575 = vmatprep.subr.bf16.mxu0 0
        %576 = vmatpush1.bf16.msra.mxu0 0
        %577 = vmatprep.subr.bf16.mxu0 0
        %578 = vmatpush1.bf16.msra.mxu0 0
        %579 = vmatprep.subr.bf16.mxu0 0
        %580 = vmatpush1.bf16.msra.mxu0 0
        %581 = vmatprep.subr.bf16.mxu0 0
        %582 = vmatpush1.bf16.msra.mxu0 0
        %583 = vmatprep.subr.bf16.mxu0 0
        %584 = vmatpush1.bf16.msra.mxu0 0
        %585 = vmatprep.subr.bf16.mxu0 0
        %586 = vmatpush1.bf16.msra.mxu0 0
        %587 = vmatprep.mubr.bf16.mxu0 0
        %588 = vmatmul.mubr.bf16.gmra.mrb[0].mxu0 %v483
        %v589 = vpop.f32.mrb[0].mxu0
        %v590 = vadd.f32 %v505, %v589
        %v591 = vpop.f32.mrb[0].mxu0
        %v592 = vpop.f32.mrb[0].mxu0
        %v593 = vpop.f32.mrb[0].mxu0
        %594 = vdwg.mxu0
        %v595 = vmax.f32 %v590, 0.0
        %v596 = vpack.c.bf16 %v595, %v595
        %597 = vst [vmem:[#allocation2] sm:$0xf] %v596
        %v598 = vld [vmem:[#allocation2] sm:$0xf]
        %s599 = scalar_lea.vmem %s335, 64 [#allocation3]
        %v600 = vld [vmem:[%s599] sm:$0xf]
        %v601 = vld [vmem:[%s599 + $0x4] sm:$0xf]
        %v602 = vld [vmem:[%s599 + $0x8] sm:$0xf]
        %v603 = vld [vmem:[%s599 + $0xc] sm:$0xf]
        %v604 = vld [vmem:[%s599 + $0x10] sm:$0xf]
        %v605 = vld [vmem:[%s599 + $0x14] sm:$0xf]
        %v606 = vld [vmem:[%s599 + $0x18] sm:$0xf]
        %v607 = vld [vmem:[%s599 + $0x1c] sm:$0xf]
        %v608 = vld [vmem:[%s599 + $0x20] sm:$0xf]
        %v609 = vld [vmem:[%s599 + $0x24] sm:$0xf]
        %v610 = vld [vmem:[%s599 + $0x28] sm:$0xf]
        %v611 = vld [vmem:[%s599 + $0x2c] sm:$0xf]
        %v612 = vld [vmem:[%s599 + $0x30] sm:$0xf]
        %v613 = vld [vmem:[%s599 + $0x34] sm:$0xf]
        %v614 = vld [vmem:[%s599 + $0x38] sm:$0xf]
        %v615 = vld [vmem:[%s599 + $0x3c] sm:$0xf]
        %s616 = scalar_lea.vmem %s406, 1
        %v617 = vld [vmem:[%s616] sm:$0x1]
        %v619 = vlaneseq
        %v620 = vshrl.u32 %v619, 7
        %v621 = vsub.s32 0, %v620
        %v622 = vrot.slane %v617, %v621
        %v640 = vunpack.c.l.b16 %v600
        %v641 = vunpack.c.l.b16 %v601
        %v642 = vunpack.c.l.b16 %v602
        %v643 = vunpack.c.l.b16 %v603
        %v644 = vunpack.c.l.b16 %v604
        %v645 = vunpack.c.l.b16 %v605
        %v646 = vunpack.c.l.b16 %v606
        %v647 = vunpack.c.l.b16 %v607
        %v648 = vunpack.c.l.b16 %v608
        %v649 = vunpack.c.l.b16 %v609
        %v650 = vunpack.c.l.b16 %v610
        %v651 = vunpack.c.l.b16 %v611
        %v652 = vunpack.c.l.b16 %v612
        %v653 = vunpack.c.l.b16 %v613
        %v654 = vunpack.c.l.b16 %v614
        %v655 = vunpack.c.l.b16 %v615
        %v656 = vpack.c.b16 %v641, %v640
        %v657 = vpack.c.b16 %v643, %v642
        %v658 = vpack.c.b16 %v645, %v644
        %v659 = vpack.c.b16 %v647, %v646
        %v660 = vpack.c.b16 %v649, %v648
        %v661 = vpack.c.b16 %v651, %v650
        %v662 = vpack.c.b16 %v653, %v652
        %v663 = vpack.c.b16 %v655, %v654
        %672 = vmatprep.subr.bf16.mxu0 0
        %673 = vmatpush1.bf16.msra.mxu0 %v656
        %674 = vmatprep.subr.bf16.mxu0 0
        %675 = vmatpush1.bf16.msra.mxu0 %v657
        %676 = vmatprep.subr.bf16.mxu0 0
        %677 = vmatpush1.bf16.msra.mxu0 %v658
        %678 = vmatprep.subr.bf16.mxu0 0
        %679 = vmatpush1.bf16.msra.mxu0 %v659
        %680 = vmatprep.subr.bf16.mxu0 0
        %681 = vmatpush1.bf16.msra.mxu0 %v660
        %682 = vmatprep.subr.bf16.mxu0 0
        %683 = vmatpush1.bf16.msra.mxu0 %v661
        %684 = vmatprep.subr.bf16.mxu0 0
        %685 = vmatpush1.bf16.msra.mxu0 %v662
        %686 = vmatprep.subr.bf16.mxu0 0
        %687 = vmatpush1.bf16.msra.mxu0 %v663
        %688 = vmatprep.subr.bf16.mxu0 0
        %689 = vmatpush1.bf16.msra.mxu0 0
        %690 = vmatprep.subr.bf16.mxu0 0
        %691 = vmatpush1.bf16.msra.mxu0 0
        %692 = vmatprep.subr.bf16.mxu0 0
        %693 = vmatpush1.bf16.msra.mxu0 0
        %694 = vmatprep.subr.bf16.mxu0 0
        %695 = vmatpush1.bf16.msra.mxu0 0
        %696 = vmatprep.subr.bf16.mxu0 0
        %697 = vmatpush1.bf16.msra.mxu0 0
        %698 = vmatprep.subr.bf16.mxu0 0
        %699 = vmatpush1.bf16.msra.mxu0 0
        %700 = vmatprep.subr.bf16.mxu0 0
        %701 = vmatpush1.bf16.msra.mxu0 0
        %702 = vmatprep.subr.bf16.mxu0 0
        %703 = vmatpush1.bf16.msra.mxu0 0
        %704 = vmatprep.mubr.bf16.mxu0 0
        %705 = vmatmul.mubr.bf16.gmra.mrb[0].mxu0 %v598
        %v706 = vpop.f32.mrb[0].mxu0
        %v707 = vadd.f32 %v622, %v706
        %v708 = vpop.f32.mrb[0].mxu0
        %v709 = vpop.f32.mrb[0].mxu0
        %v710 = vpop.f32.mrb[0].mxu0
        %711 = vdwg.mxu0
        %v712 = vmax.f32 %v707, 0.0
        %v713 = vpack.c.bf16 %v712, %v712
        %714 = vst [vmem:[#allocation2] sm:$0xf] %v713
        %v715 = vld [vmem:[#allocation2] sm:$0xf]
        %v716 = vld [vmem:[%s411] sm:$0xf]
        %v717 = vld [vmem:[%s411 + $0x4] sm:$0xf]
        %v718 = vld [vmem:[%s411 + $0x8] sm:$0xf]
        %v719 = vld [vmem:[%s411 + $0xc] sm:$0xf]
        %v720 = vld [vmem:[%s411 + $0x10] sm:$0xf]
        %v721 = vld [vmem:[%s411 + $0x14] sm:$0xf]
        %v722 = vld [vmem:[%s411 + $0x18] sm:$0xf]
        %v723 = vld [vmem:[%s411 + $0x1c] sm:$0xf]
        %v724 = vld [vmem:[%s411 + $0x20] sm:$0xf]
        %v725 = vld [vmem:[%s411 + $0x24] sm:$0xf]
        %v726 = vld [vmem:[%s411 + $0x28] sm:$0xf]
        %v727 = vld [vmem:[%s411 + $0x2c] sm:$0xf]
        %v728 = vld [vmem:[%s411 + $0x30] sm:$0xf]
        %v729 = vld [vmem:[%s411 + $0x34] sm:$0xf]
        %v730 = vld [vmem:[%s411 + $0x38] sm:$0xf]
        %v731 = vld [vmem:[%s411 + $0x3c] sm:$0xf]
        %v748 = vunpack.c.l.b16 %v716
        %v749 = vunpack.c.l.b16 %v717
        %v750 = vunpack.c.l.b16 %v718
        %v751 = vunpack.c.l.b16 %v719
        %v752 = vunpack.c.l.b16 %v720
        %v753 = vunpack.c.l.b16 %v721
        %v754 = vunpack.c.l.b16 %v722
        %v755 = vunpack.c.l.b16 %v723
        %v756 = vunpack.c.l.b16 %v724
        %v757 = vunpack.c.l.b16 %v725
        %v758 = vunpack.c.l.b16 %v726
        %v759 = vunpack.c.l.b16 %v727
        %v760 = vunpack.c.l.b16 %v728
        %v761 = vunpack.c.l.b16 %v729
        %v762 = vunpack.c.l.b16 %v730
        %v763 = vunpack.c.l.b16 %v731
        %v764 = vpack.c.b16 %v749, %v748
        %v765 = vpack.c.b16 %v751, %v750
        %v766 = vpack.c.b16 %v753, %v752
        %v767 = vpack.c.b16 %v755, %v754
        %v768 = vpack.c.b16 %v757, %v756
        %v769 = vpack.c.b16 %v759, %v758
        %v770 = vpack.c.b16 %v761, %v760
        %v771 = vpack.c.b16 %v763, %v762
        %780 = vmatprep.subr.bf16.mxu0 0
        %781 = vmatpush1.bf16.msra.mxu0 %v764
        %782 = vmatprep.subr.bf16.mxu0 0
        %783 = vmatpush1.bf16.msra.mxu0 %v765
        %784 = vmatprep.subr.bf16.mxu0 0
        %785 = vmatpush1.bf16.msra.mxu0 %v766
        %786 = vmatprep.subr.bf16.mxu0 0
        %787 = vmatpush1.bf16.msra.mxu0 %v767
        %788 = vmatprep.subr.bf16.mxu0 0
        %789 = vmatpush1.bf16.msra.mxu0 %v768
        %790 = vmatprep.subr.bf16.mxu0 0
        %791 = vmatpush1.bf16.msra.mxu0 %v769
        %792 = vmatprep.subr.bf16.mxu0 0
        %793 = vmatpush1.bf16.msra.mxu0 %v770
        %794 = vmatprep.subr.bf16.mxu0 0
        %795 = vmatpush1.bf16.msra.mxu0 %v771
        %796 = vmatprep.subr.bf16.mxu0 0
        %797 = vmatpush1.bf16.msra.mxu0 0
        %798 = vmatprep.subr.bf16.mxu0 0
        %799 = vmatpush1.bf16.msra.mxu0 0
        %800 = vmatprep.subr.bf16.mxu0 0
        %801 = vmatpush1.bf16.msra.mxu0 0
        %802 = vmatprep.subr.bf16.mxu0 0
        %803 = vmatpush1.bf16.msra.mxu0 0
        %804 = vmatprep.subr.bf16.mxu0 0
        %805 = vmatpush1.bf16.msra.mxu0 0
        %806 = vmatprep.subr.bf16.mxu0 0
        %807 = vmatpush1.bf16.msra.mxu0 0
        %808 = vmatprep.subr.bf16.mxu0 0
        %809 = vmatpush1.bf16.msra.mxu0 0
        %810 = vmatprep.subr.bf16.mxu0 0
        %811 = vmatpush1.bf16.msra.mxu0 0
        %812 = vmatprep.mubr.bf16.mxu0 0
        %813 = vmatmul.mubr.bf16.gmra.mrb[0].mxu0 %v715
        %v814 = vpop.f32.mrb[0].mxu0
        %v815 = vadd.f32 0.0, %v814
        %v816 = vpop.f32.mrb[0].mxu0
        %v817 = vpop.f32.mrb[0].mxu0
        %v818 = vpop.f32.mrb[0].mxu0
        %819 = vdwg.mxu0
        %820 = vxpose.xlu0.b32.start [1/16] %v815, 128
        %821 = vxpose.xlu0.b32.cont [2/16] 0.0, 128
        %822 = vxpose.xlu0.b32.cont [3/16] 0.0, 128
        %823 = vxpose.xlu0.b32.cont [4/16] 0.0, 128
        %824 = vxpose.xlu0.b32.cont [5/16] 0.0, 128
        %825 = vxpose.xlu0.b32.cont [6/16] 0.0, 128
        %826 = vxpose.xlu0.b32.cont [7/16] 0.0, 128
        %827 = vxpose.xlu0.b32.cont [8/16] 0.0, 128
        %828 = vxpose.xlu0.b32.cont [9/16] 0.0, 128
        %829 = vxpose.xlu0.b32.cont [10/16] 0.0, 128
        %830 = vxpose.xlu0.b32.cont [11/16] 0.0, 128
        %831 = vxpose.xlu0.b32.cont [12/16] 0.0, 128
        %832 = vxpose.xlu0.b32.cont [13/16] 0.0, 128
        %833 = vxpose.xlu0.b32.cont [14/16] 0.0, 128
        %834 = vxpose.xlu0.b32.cont [15/16] 0.0, 128
        %835 = vxpose.xlu0.b32.end [16/16] 0.0, 128
        %v836 = vpop.trf.xlu0
        %v837 = vpop.trf.xlu0
        %v838 = vpop.trf.xlu0
        %v839 = vpop.trf.xlu0
        %v840 = vpop.trf.xlu0
        %v841 = vpop.trf.xlu0
        %v842 = vpop.trf.xlu0
        %v843 = vpop.trf.xlu0
        %v844 = vpop.trf.xlu0
        %v845 = vpop.trf.xlu0
        %v846 = vpop.trf.xlu0
        %v847 = vpop.trf.xlu0
        %v848 = vpop.trf.xlu0
        %v849 = vpop.trf.xlu0
        %v850 = vpop.trf.xlu0
        %v851 = vpop.trf.xlu0
        %s852 = sld [smem:[#allocation7 + %s29]]
        %v853 = vstv %s852
        %v854 = vadd.f32 %v836, %v853
        %vm855 = vcmask 57344
        %856 = vst.msk [vmem:[%s390] sm:$0x1] %vm855, %v854
        %s857 = sand.u32 %s224, 1
        %s858 = scalar_lea.sflag [#allocation5], %s857
        %s859 = sand.u32 %s224, 1
        %s860 = scalar_lea.vmem [#allocation8], %s859
        // Predicated region
        $region57: #{tpu_custom_call.1} parent=47 // pred_check
          %p861 = pneg %p234
        $region58: #{tpu_custom_call.1} parent=47 // pred_check_branch
          %863 = sbr.rel (%p861) target = $region60
        $region59: #{tpu_custom_call.1} parent=47 // pred_region
          %s865 = ssub.s32 16, 16
          %866 = vsyncadd %s858, %s865
          %s867 = sadd.s32 %s30, %s29
          %s868 = smul.addr %s867, 16
          %s869 = scalar_lea.hbm %s7, %s868
          %s871 = sshll.u32 %s860, 4
          %s872 = int_to_ptr.vmem [resolvable:$true] %s871
          %874 = dma.vmem_to_hbm [thread:$0]  %s872, 16, %s869, %s858
        $region60: #{tpu_custom_call.1} parent=47 // pred_fallthru
          _
      $region48: #{tpu_custom_call.1} parent=5 // pred_fallthru
        _
      %p875 = scmp.le.s32.totalorder 2, %s20
      // Predicated region
      $region61: #{tpu_custom_call.1} parent=5 // pred_check
        %p876 = pneg %p875
      $region62: #{tpu_custom_call.1} parent=5 // pred_check_branch
        %878 = sbr.rel (%p876) target = $region64
      $region63: #{tpu_custom_call.1} parent=5 // pred_region
        %s879 = ssub.s32 %s20, 2
        // Predicated region
        $region65: #{tpu_custom_call.1} parent=63 // pred_check
          %p880 = pneg %p240
        $region66: #{tpu_custom_call.1} parent=63 // pred_check_branch
          %882 = sbr.rel (%p880) target = $region68
        $region67: #{tpu_custom_call.1} parent=63 // pred_region
          %s883 = sand.u32 %s225, 1
          %s884 = scalar_lea.sflag [#allocation5], %s883
          %s885 = sand.u32 %s225, 1
          %s886 = scalar_lea.vmem [#allocation8], %s885
          %887 = dma.done %s884, 16
        $region68: #{tpu_custom_call.1} parent=63 // pred_fallthru
          _
      $region64: #{tpu_custom_call.1} parent=5 // pred_fallthru
        _
    $region6: #{tpu_custom_call.1} parent=1 // loop_footer
      %s24 = sadd.s32 1, %s20
    $region7: #{tpu_custom_call.1} parent=1 // loop_footer_branch
      %19 = sbr.rel target = $region3
    $region8: #{tpu_custom_call.1} parent=1 // loop_exit
      _
    %888 = vsyncpa [#allocation4], 1
    %s889 = scalar_lea.sflag [#allocation4], 1
    %890 = vsyncpa %s889, 1
    %891 = vsyncpa [#allocation5], 1
    %s892 = scalar_lea.sflag [#allocation5], 1
    %893 = vsyncpa %s892, 1
    %894 = vsyncpa [#allocation6], 1
    %s895 = scalar_lea.sflag [#allocation6], 1
    %896 = vsyncpa %s895, 1

</llo_original>
